<compile_context>
chip_gen: v5e
topology: v5e:2x2
jax: 0.10.0
libtpu: 0.0.40
codegen_flags: <defaults>
</compile_context>

<pallas_src>
import jax
import jax.numpy as jnp
from jax.experimental import pallas as pl
from jax.experimental.pallas import tpu as pltpu

EPS = 1e-6


def _round_up(n, m):
    return ((n + m - 1) // m) * m


def _layernorm_kernel(x_ref, alpha_ref, bias_ref, o_ref):
    # x_ref: (TM, F) row tile; alpha/bias: (1, F), grid-invariant.
    a = alpha_ref[...]            # loaded once per tile, broadcast over rows
    b = bias_ref[...]
    x = x_ref[...]
    f = x.shape[-1]

    # Two-pass mean/var for accuracy (matches the torch reference closely).
    row_sum = jnp.sum(x, axis=-1, keepdims=True)
    mean = row_sum * (1.0 / f)
    diff = x - mean
    # torch.std default: unbiased (Bessel's correction, divide by N-1)
    var = jnp.sum(diff * diff, axis=-1, keepdims=True) * (1.0 / (f - 1))
    std = jnp.sqrt(var)
    # One reciprocal per row (TM,1), exact so the 1e-5 check holds, then a
    # single broadcast multiply over F lanes.
    inv = pl.reciprocal(std + EPS, approx=False)
    o_ref[...] = (a * (diff * inv) + b).astype(o_ref.dtype)


def layer_norm_pallas(x2d, alpha, bias, *,
                      max_tile_rows=1024,
                      vmem_budget_bytes=24 * 1024 * 1024):
    """LayerNorm over the last axis of x2d: (R, F), params (F,)."""
    R, F = x2d.shape
    itemsize = jnp.dtype(x2d.dtype).itemsize
    bytes_per_row = F * itemsize

    # Cap tile so ~4 row-tile buffers (in + out, double-buffered) fit the
    # budget on every generation (v5e 16 MiB default scoped, v7x 64 MiB phys).
    cap_rows = max(8, (vmem_budget_bytes // (4 * bytes_per_row)) // 8 * 8)
    tile_rows = min(max_tile_rows, cap_rows, _round_up(R, 8))
    tile_rows = max(8, (tile_rows // 8) * 8)

    # Pad rows up to a multiple of the tile; padded rows are zeros (safe:
    # diff=0 so the normalized result is just `bias`, and they are sliced off).
    R_pad = _round_up(R, tile_rows)
    xp = x2d if R_pad == R else jnp.pad(x2d, ((0, R_pad - R), (0, 0)))

    alpha2d = alpha.reshape(1, F).astype(x2d.dtype)
    bias2d = bias.reshape(1, F).astype(x2d.dtype)

    grid = (R_pad // tile_rows,)
    out = pl.pallas_call(
        _layernorm_kernel,
        out_shape=jax.ShapeDtypeStruct((R_pad, F), x2d.dtype),
        grid_spec=pl.GridSpec(
            grid=grid,
            in_specs=[
                pl.BlockSpec((tile_rows, F), lambda i: (i, 0)),
                pl.BlockSpec((1, F), lambda i: (0, 0)),
                pl.BlockSpec((1, F), lambda i: (0, 0)),
            ],
            out_specs=pl.BlockSpec((tile_rows, F), lambda i: (i, 0)),
        ),
        compiler_params=pltpu.CompilerParams(
            dimension_semantics=("parallel",),
            vmem_limit_bytes=32 * 1024 * 1024,
        ),
    )(xp, alpha2d, bias2d)

    return out if R_pad == R else out[:R]


def decoder_forward(x, encoder_output, src_mask, tgt_mask, params):
    """Decoder.forward: run (empty) layer stack, then LayerNormalization.

    x: (B, S, F); encoder_output/src_mask/tgt_mask accepted for signature
    parity (unused because the layer list is empty).
    """
    # for layer in self.layers: x = layer(x, encoder_output, src_mask, tgt_mask)
    # -> empty ModuleList: identity.
    B, S, F = x.shape
    y2d = layer_norm_pallas(x.reshape(B * S, F), params["alpha"], params["bias"])
    return y2d.reshape(B, S, F)


def _reference_decoder(x, alpha, bias):
    mean = jnp.mean(x, axis=-1, keepdims=True)
    # unbiased std, matching torch.Tensor.std default
    var = jnp.sum((x - mean) ** 2, axis=-1, keepdims=True) / (x.shape[-1] - 1)
    std = jnp.sqrt(var)
    return alpha * (x - mean) / (std + EPS) + bias


if __name__ == "__main__":
    key = jax.random.PRNGKey(0)
    B, S, F = 2, 8, 128  # batch=2, seq=8, features=128

    kx, ke = jax.random.split(key)
    x = jax.random.normal(kx, (B, S, F), dtype=jnp.float32)
    encoder_output = jax.random.normal(ke, (B, S, F), dtype=jnp.float32)
    src_mask = jnp.ones((B, 1, 1, S), dtype=jnp.float32)
    tgt_mask = jnp.tril(jnp.ones((S, S), dtype=jnp.float32))[None, None]

    # Deterministic parameter init matching LayerNormalization.__init__:
    # alpha = ones(features), bias = zeros(features)
    params = {
        "alpha": jnp.ones((F,), dtype=jnp.float32),
        "bias": jnp.zeros((F,), dtype=jnp.float32),
    }

    out = decoder_forward(x, encoder_output, src_mask, tgt_mask, params)
    out = jax.block_until_ready(out)

    ref = _reference_decoder(x, params["alpha"], params["bias"])
    assert out.shape == (B, S, F)
    assert jnp.allclose(out, ref, atol=1e-5, rtol=1e-5), "mismatch vs reference"

    print("KERNEL_OK")
</pallas_src>

<mosaic_0001>
module attributes {stable_mosaic.version = 11 : i64} {
  func.func @_layernorm_kernel(%arg0: i32, %arg1: memref<16x128xf32, #tpu.memory_space<vmem>>, %arg2: memref<1x128xf32, #tpu.memory_space<vmem>>, %arg3: memref<1x128xf32, #tpu.memory_space<vmem>>, %arg4: memref<16x128xf32, #tpu.memory_space<vmem>>) attributes {dimension_semantics = [#tpu.dimension_semantics<parallel>], iteration_bounds = array<i64: 1>, scalar_prefetch = 0 : i64, scratch_operands = 0 : i64, tpu.core_type = #tpu.core_type<tc>, window_params = [{transform_indices = @transform_0, window_bounds = array<i64: 16, 128>}, {pipeline_mode = #tpu.pipeline_mode<synchronous>, transform_indices = @transform_1, window_bounds = array<i64: 1, 128>}, {pipeline_mode = #tpu.pipeline_mode<synchronous>, transform_indices = @transform_2, window_bounds = array<i64: 1, 128>}, {transform_indices = @transform_3, window_bounds = array<i64: 16, 128>}]} {
    %c0 = arith.constant 0 : index
    %c0_0 = arith.constant 0 : index
    %0 = vector.load %arg2[%c0, %c0_0] : memref<1x128xf32, #tpu.memory_space<vmem>>, vector<1x128xf32>
    %c0_1 = arith.constant 0 : index
    %c0_2 = arith.constant 0 : index
    %1 = vector.load %arg3[%c0_1, %c0_2] : memref<1x128xf32, #tpu.memory_space<vmem>>, vector<1x128xf32>
    %c0_3 = arith.constant 0 : index
    %c0_4 = arith.constant 0 : index
    %2 = vector.load %arg1[%c0_3, %c0_4] : memref<16x128xf32, #tpu.memory_space<vmem>>, vector<16x128xf32>
    %cst = arith.constant dense<0.000000e+00> : vector<16xf32>
    %3 = vector.multi_reduction <add>, %2, %cst [1] : vector<16x128xf32> to vector<16xf32>
    %4 = vector.shape_cast %3 : vector<16xf32> to vector<16x1xf32>
    %cst_5 = arith.constant 7.812500e-03 : f32
    %5 = vector.broadcast %cst_5 : f32 to vector<16x1xf32>
    %6 = arith.mulf %4, %5 : vector<16x1xf32>
    %7 = vector.broadcast %6 : vector<16x1xf32> to vector<16x128xf32>
    %8 = arith.subf %2, %7 : vector<16x128xf32>
    %9 = arith.mulf %8, %8 : vector<16x128xf32>
    %cst_6 = arith.constant dense<0.000000e+00> : vector<16xf32>
    %10 = vector.multi_reduction <add>, %9, %cst_6 [1] : vector<16x128xf32> to vector<16xf32>
    %11 = vector.shape_cast %10 : vector<16xf32> to vector<16x1xf32>
    %cst_7 = arith.constant 0.00787401571 : f32
    %12 = vector.broadcast %cst_7 : f32 to vector<16x1xf32>
    %13 = arith.mulf %11, %12 : vector<16x1xf32>
    %14 = math.sqrt %13 : vector<16x1xf32>
    %cst_8 = arith.constant 9.99999997E-7 : f32
    %15 = vector.broadcast %cst_8 : f32 to vector<16x1xf32>
    %16 = arith.addf %14, %15 : vector<16x1xf32>
    %17 = tpu.reciprocal %16 : vector<16x1xf32> -> vector<16x1xf32>
    %18 = vector.broadcast %17 : vector<16x1xf32> to vector<16x128xf32>
    %19 = arith.mulf %8, %18 : vector<16x128xf32>
    %20 = vector.broadcast %0 : vector<1x128xf32> to vector<16x128xf32>
    %21 = arith.mulf %20, %19 : vector<16x128xf32>
    %22 = vector.broadcast %1 : vector<1x128xf32> to vector<16x128xf32>
    %23 = arith.addf %21, %22 : vector<16x128xf32>
    %c0_9 = arith.constant 0 : index
    %c0_10 = arith.constant 0 : index
    %24 = vector.load %arg4[%c0_9, %c0_10] : memref<16x128xf32, #tpu.memory_space<vmem>>, vector<16x128xf32>
    tpu.vector_store %arg4[%c0_9, %c0_10], %23 {strides = array<i32>} : memref<16x128xf32, #tpu.memory_space<vmem>>, vector<16x128xf32>,
    return
  }
  func.func @transform_0(%arg0: i32) -> (i32, i32) {
    %c0_i32 = arith.constant 0 : i32
    %c0_i32_0 = arith.constant 0 : i32
    return %arg0, %c0_i32 : i32, i32
  }
  func.func @transform_1(%arg0: i32) -> (i32, i32) {
    %c0_i32 = arith.constant 0 : i32
    %c0_i32_0 = arith.constant 0 : i32
    %c0_i32_1 = arith.constant 0 : i32
    return %c0_i32, %c0_i32_0 : i32, i32
  }
  func.func @transform_2(%arg0: i32) -> (i32, i32) {
    %c0_i32 = arith.constant 0 : i32
    %c0_i32_0 = arith.constant 0 : i32
    %c0_i32_1 = arith.constant 0 : i32
    return %c0_i32, %c0_i32_0 : i32, i32
  }
  func.func @transform_3(%arg0: i32) -> (i32, i32) {
    %c0_i32 = arith.constant 0 : i32
    %c0_i32_0 = arith.constant 0 : i32
    return %arg0, %c0_i32 : i32, i32
  }
}

</mosaic_0001>

<llo_original>
// kernel: tpu_custom_call.1
$region0: #{tpu_custom_call.1}
  #allocation0 [shape = 'u32[]', space=smem, size = 0x4, offset = 0x4, fixed_abs, tag = 'smem constant byte address 0x4 - core index']
  #allocation1 [shape = 'u32[72,128]{1,0:T(1,128)}', space=vmem, size = 0x9000, scoped, tag = 'internal scratch']
  %s0 = inlined_call_operand.hbm [shape: f32[16,128], index: 0, kind: input, shape index: {}]
  %s1 = inlined_call_operand.hbm [shape: f32[1,128], index: 1, kind: input, shape index: {}]
  %s2 = inlined_call_operand.vmem [shape: f32[1,128], index: 2, kind: input, shape index: {}]
  %s3 = inlined_call_operand.hbm [shape: f32[16,128], index: 3, kind: output, shape index: {}]
  %s4 = sld [smem:[#allocation0]]
  $region30: #{tpu_custom_call.1} parent=0
    _
  %s6 = ssub.s32 1, %s4
  %s7 = scalar_select 0, %s6, %s4
  $region1: #{tpu_custom_call.1} parent=0
    #allocation2 [shape = 'u8[8192]{0}', space=vmem, size = 0x2000, scoped, tag = 'input window, operand 0, single buffered']
    #allocation3 [shape = 's32[1]{0}', space=sflag, size = 0x4, scoped, tag = 'scoped memory for tpu_custom_call.1']
    #allocation4 [shape = 's32[1]{0}', space=sflag, size = 0x4, scoped, tag = 'scoped memory for tpu_custom_call.1']
    #allocation5 [shape = 'u8[512]{0}', space=vmem, size = 0x400, scoped, tag = 'input window, operand 1, single buffered']
    #allocation6 [shape = 's32[1]{0}', space=sflag, size = 0x4, scoped, tag = 'scoped memory for tpu_custom_call.1']
    #allocation7 [shape = 'u8[8192]{0}', space=vmem, size = 0x2000, scoped, tag = 'output window, operand 0, single buffered']
    %8 = vsyncpa [#allocation3], 0
    %9 = vsyncpa [#allocation6], 0
    %10 = vsyncpa [#allocation4], 0
    // Predicated region
    $region2: #{tpu_custom_call.1} parent=1 // pred_check
      _
    $region3: #{tpu_custom_call.1} parent=1 // pred_check_branch
      %12 = sbr.rel (0) target = $region5
    $region4: #{tpu_custom_call.1} parent=1 // pred_region
      %14 = vsyncadd [#allocation3], 0
      %s15 = sshll.u32 %s0, 4
      %s16 = int_to_ptr.hbm [resolvable:$true] %s15
      %s17 = sshll.u32 [#allocation2], 4
      %s18 = int_to_ptr.vmem [resolvable:$true] %s17
      %23 = dma.hbm_to_vmem [thread:$0]  %s16, 256, %s18, [#allocation3], 128, 128, 8
    $region5: #{tpu_custom_call.1} parent=1 // pred_fallthru
      _
    // Predicated region
    $region6: #{tpu_custom_call.1} parent=1 // pred_check
      _
    $region7: #{tpu_custom_call.1} parent=1 // pred_check_branch
      %25 = sbr.rel (0) target = $region9
    $region8: #{tpu_custom_call.1} parent=1 // pred_region
      %27 = vsyncadd [#allocation6], 0
      %s29 = sshll.u32 %s1, 4
      %s30 = int_to_ptr.hbm [resolvable:$true] %s29
      %s31 = sshll.u32 [#allocation5], 4
      %s32 = int_to_ptr.vmem [resolvable:$true] %s31
      %34 = dma.hbm_to_vmem [thread:$0]  %s30, 16, %s32, [#allocation6]
    $region9: #{tpu_custom_call.1} parent=1 // pred_fallthru
      _
    // Predicated region
    $region10: #{tpu_custom_call.1} parent=1 // pred_check
      _
    $region11: #{tpu_custom_call.1} parent=1 // pred_check_branch
      %36 = sbr.rel (0) target = $region13
    $region12: #{tpu_custom_call.1} parent=1 // pred_region
      _
    $region13: #{tpu_custom_call.1} parent=1 // pred_fallthru
      _
    // Predicated region
    $region14: #{tpu_custom_call.1} parent=1 // pred_check
      _
    $region15: #{tpu_custom_call.1} parent=1 // pred_check_branch
      %38 = sbr.rel (0) target = $region17
    $region16: #{tpu_custom_call.1} parent=1 // pred_region
      %40 = dma.done [#allocation3], 256
    $region17: #{tpu_custom_call.1} parent=1 // pred_fallthru
      _
    // Predicated region
    $region18: #{tpu_custom_call.1} parent=1 // pred_check
      _
    $region19: #{tpu_custom_call.1} parent=1 // pred_check_branch
      %42 = sbr.rel (0) target = $region21
    $region20: #{tpu_custom_call.1} parent=1 // pred_region
      %44 = dma.done [#allocation6], 16
    $region21: #{tpu_custom_call.1} parent=1 // pred_fallthru
      _
    %v45 = vld [vmem:[#allocation5] sm:$0x1]
    %v46 = vld [vmem:[%s2] sm:$0x1]
    %v47 = vld [vmem:[#allocation2] sm:$0xff]
    %v48 = vld [vmem:[#allocation2 + $0x8] sm:$0xff]
    %49 = vadd.xlane.f32.xlu0 %v47
    %v50 = vpop.xlane.xlu0 %49
    %51 = vadd.xlane.f32.xlu0 %v48
    %v52 = vpop.xlane.xlu0 %51
    %v53 = vmul.f32 %v50, 0.0078125
    %v54 = vmul.f32 %v52, 0.0078125
    %v55 = vsub.f32 %v47, %v53
    %v56 = vsub.f32 %v48, %v54
    %v57 = vmul.f32 %v55, %v55
    %v58 = vmul.f32 %v56, %v56
    %59 = vadd.xlane.f32.xlu0 %v57
    %v60 = vpop.xlane.xlu0 %59
    %61 = vadd.xlane.f32.xlu0 %v58
    %v62 = vpop.xlane.xlu0 %61
    %v63 = vmul.f32 %v60, 0.007874016
    %v64 = vmul.f32 %v62, 0.007874016
    %v65 = vrsqrt.pop %v63
    %v66 = vmul.f32 %v65, %v63
    %v67 = vmul.f32 %v66, %v65
    %v68 = vmul.f32 0.5, %v67
    %v69 = vsub.f32 1.5, %v68
    %v70 = vmul.f32 %v65, %v69
    %v71 = vmul.f32 %v63, %v70
    %vm72 = vcmp.eq.f32.partialorder %v63, inf
    %v73 = vsel %vm72, %v63, %v71
    %vm74 = vcmp.eq.f32.partialorder %v63, 0.0
    %v75 = vand.u32 %v63, 2147483648
    %v76 = vsel %vm74, %v75, %v73
    %v77 = vrsqrt.pop %v64
    %v78 = vmul.f32 %v77, %v64
    %v79 = vmul.f32 %v78, %v77
    %v80 = vmul.f32 0.5, %v79
    %v81 = vsub.f32 1.5, %v80
    %v82 = vmul.f32 %v77, %v81
    %v83 = vmul.f32 %v64, %v82
    %vm84 = vcmp.eq.f32.partialorder %v64, inf
    %v85 = vsel %vm84, %v64, %v83
    %vm86 = vcmp.eq.f32.partialorder %v64, 0.0
    %v87 = vand.u32 %v64, 2147483648
    %v88 = vsel %vm86, %v87, %v85
    %v89 = vadd.f32 %v76, 1e-06
    %v90 = vadd.f32 %v88, 1e-06
    %v91 = vrcp.pop %v89
    %v92 = vmul.f32 %v89, %v91
    %v93 = vsub.f32 1.0, %v92
    %v94 = vmul.f32 %v91, %v93
    %v95 = vadd.f32 %v91, %v94
    %vm96 = vweird.f32 %v89
    %vm97 = vweird.f32 %v91
    %vm98 = vmor %vm96, %vm97
    %v99 = vsel %vm98, %v91, %v95
    %v100 = vand.u32 2147483647, %v89
    %vm101 = vcmp.eq.f32.partialorder %v100, 8.507059e+37
    %v102 = vand.u32 %v89, 2147483648
    %v103 = vor.u32 1.1754944e-38, %v102
    %v104 = vsel %vm101, %v103, %v99
    %v105 = vrcp.pop %v90
    %v106 = vmul.f32 %v90, %v105
    %v107 = vsub.f32 1.0, %v106
    %v108 = vmul.f32 %v105, %v107
    %v109 = vadd.f32 %v105, %v108
    %vm110 = vweird.f32 %v90
    %vm111 = vweird.f32 %v105
    %vm112 = vmor %vm110, %vm111
    %v113 = vsel %vm112, %v105, %v109
    %v114 = vand.u32 2147483647, %v90
    %vm115 = vcmp.eq.f32.partialorder %v114, 8.507059e+37
    %v116 = vand.u32 %v90, 2147483648
    %v117 = vor.u32 1.1754944e-38, %v116
    %v118 = vsel %vm115, %v117, %v113
    %v119 = vmul.f32 %v55, %v104
    %v120 = vmul.f32 %v56, %v118
    %v122 = vperm.slane %v45, 0
    %v124 = vmul.f32 %v122, %v119
    %v125 = vmul.f32 %v122, %v120
    %v127 = vperm.slane %v46, 0
    %v129 = vadd.f32 %v124, %v127
    %v130 = vadd.f32 %v125, %v127
    %131 = vst [vmem:[#allocation7] sm:$0xff] %v129
    %132 = vst [vmem:[#allocation7 + $0x8] sm:$0xff] %v130
    // Predicated region
    $region22: #{tpu_custom_call.1} parent=1 // pred_check
      _
    $region23: #{tpu_custom_call.1} parent=1 // pred_check_branch
      %134 = sbr.rel (0) target = $region25
    $region24: #{tpu_custom_call.1} parent=1 // pred_region
      %136 = vsyncadd [#allocation4], 0
      %s137 = sshll.u32 [#allocation7], 4
      %s138 = int_to_ptr.vmem [resolvable:$true] %s137
      %s139 = sshll.u32 %s3, 4
      %s140 = int_to_ptr.hbm [resolvable:$true] %s139
      %145 = dma.vmem_to_hbm [thread:$0]  %s138, 256, %s140, [#allocation4], 128, 128, 8
    $region25: #{tpu_custom_call.1} parent=1 // pred_fallthru
      _
    // Predicated region
    $region26: #{tpu_custom_call.1} parent=1 // pred_check
      _
    $region27: #{tpu_custom_call.1} parent=1 // pred_check_branch
      %147 = sbr.rel (0) target = $region29
    $region28: #{tpu_custom_call.1} parent=1 // pred_region
      %149 = dma.done [#allocation4], 256
    $region29: #{tpu_custom_call.1} parent=1 // pred_fallthru
      _
    %150 = vsyncpa [#allocation3], 1
    %151 = vsyncpa [#allocation6], 1
    %152 = vsyncpa [#allocation4], 1

</llo_original>
